<compile_context>
chip_gen: v5e
topology: v5e:2x2
jax: 0.10.0
libtpu: 0.0.40
codegen_flags: <defaults>
</compile_context>

<pallas_src>
import jax
import jax.numpy as jnp
import numpy as np
from jax import lax
from jax.experimental import pallas as pl
from jax.experimental.pallas import tpu as pltpu

# ---- hyper-parameters (DistilLoss / CELoss defaults) ------------------------
ALPHA = 0.1             # teacher / label trade-off
TEMPERATURE = 1.0       # CE temperature (applied to CE branch only, as in reference)
LABEL_SMOOTHING = 0.0   # DistilLoss default (keep_sum=True branch if > 0)
# reduction = 'sum', from_logits = True, multilabel = False


# ---- generation-aware tile sizing -------------------------------------------
def _tpu_vmem_bytes():
    try:
        info = pltpu.get_tpu_info()
        return int(getattr(info, "vmem_capacity_bytes", 64 * 1024 * 1024))
    except Exception:
        # conservative fallback (v7x-sized VMEM) if no TPU info is available
        return 64 * 1024 * 1024


def _pick_tile_and_limit(B, C):
    """Pick the batch tile TB and scoped-VMEM limit from the chip's VMEM capacity.

    Per-row working set (bytes):
      2 bf16 logit streams, double-buffered : 2 * 2 * C * 2 = 8*C
      int32 label stream,  double-buffered  : 2 * 4         = 8
      ~12 live f32 (TB, C) temporaries      : 48*C
    """
    vmem = _tpu_vmem_bytes()
    per_row = 8 * C + 8 + 48 * C
    # cap the working set well under the scoped limit (v7x: 64 MiB physical)
    budget = min(int(vmem * 0.4), 48 * 1024 * 1024)
    tb = max(8, (budget // per_row) // 8 * 8)
    tb = min(tb, 2048)                               # diminishing returns past ~2k rows
    tb = min(tb, max(8, ((B + 7) // 8) * 8))         # never bigger than the batch
    vmem_limit = max(32 * 1024 * 1024, min(int(vmem * 3 // 4), 96 * 1024 * 1024))
    return int(tb), int(vmem_limit)


# ---- Pallas kernel + wrapper -------------------------------------------------
def distil_loss_pallas(student_logits, teacher_logits_sliced, labels, class_weights_row):
    """student/teacher logits: (B, C) bf16; labels: (B,) int; class_weights_row: (1, C) f32.
    Returns the scalar f32 loss (reduction='sum')."""
    B, C = student_logits.shape
    tb, vmem_limit = _pick_tile_and_limit(B, C)
    num_tiles = pl.cdiv(B, tb)
    labels2d = labels.astype(jnp.int32).reshape(B, 1)

    def kernel(x_ref, t_ref, lbl_ref, w_ref, out_ref):
        # x_ref/t_ref: (tb, C) bf16, lbl_ref: (tb, 1) i32, w_ref: (1, C) f32
        i = pl.program_id(0)
        rows_valid = jnp.minimum(jnp.int32(B) - i * jnp.int32(tb), jnp.int32(tb))
        row_ids = lax.broadcasted_iota(jnp.int32, (tb, 1), 0)
        row_mask = row_ids < rows_valid                          # masks the tail tile

        # mask out-of-range rows BEFORE exp (tail-tile OOB data may be garbage)
        x = jnp.where(row_mask, x_ref[...].astype(jnp.float32), 0.0)
        t = jnp.where(row_mask, t_ref[...].astype(jnp.float32), 0.0)
        w = w_ref[...].astype(jnp.float32)                        # (1, C)
        lbl = lbl_ref[...]                                        # (tb, 1) i32

        # one-hot target rebuilt in-kernel (no dense (B,C) target stream)
        col_ids = lax.broadcasted_iota(jnp.int32, (tb, C), 1)
        y = (col_ids == lbl).astype(jnp.float32)
        if LABEL_SMOOTHING > 0.0:
            # keep_sum=True smoothing with one-hot rows (row-sum == 1), analytically
            bias = LABEL_SMOOTHING / (C - 1.0)
            y = (1.0 - LABEL_SMOOTHING - bias) * y + bias

        # ---------- student log_softmax(x / tau) pieces: single full-tile exp ----------
        xs = x if TEMPERATURE == 1.0 else x * jnp.float32(1.0 / TEMPERATURE)
        xm = jnp.max(xs, axis=-1, keepdims=True)
        xz = xs - xm
        exp_xz = jnp.exp(xz)                                      # full-tile exp #1
        sum_xz = jnp.sum(exp_xz, axis=-1, keepdims=True)
        log_sum_x = jnp.log(sum_xz)

        # ---------- softmax(x): KLDivLoss 'input' (reference passes softmax, not log) ----------
        if TEMPERATURE == 1.0:
            p_s = exp_xz * pl.reciprocal(sum_xz, approx=True)
        else:
            xz2 = x - xm * jnp.float32(TEMPERATURE)
            exp2 = jnp.exp(xz2)
            p_s = exp2 * pl.reciprocal(jnp.sum(exp2, axis=-1, keepdims=True), approx=True)

        # ---------- teacher softmax / log_softmax: single full-tile exp, reused ----------
        tmax = jnp.max(t, axis=-1, keepdims=True)
        tz = t - tmax
        exp_tz = jnp.exp(tz)                                      # full-tile exp #2
        sum_tz = jnp.sum(exp_tz, axis=-1, keepdims=True)
        log_sum_t = jnp.log(sum_tz)
        p_t = exp_tz * pl.reciprocal(sum_tz, approx=False)        # exact: scales log terms

        # ---------- fused reduction ----------
        # CE: sum(-w*y*log_softmax) expanded as sum(-w*y*xz) + log(sum)*sum(w*y)
        wy = w * y
        ce_row = (jnp.sum(-wy * xz, axis=-1, keepdims=True)
                  + log_sum_x * jnp.sum(wy, axis=-1, keepdims=True))          # (tb, 1)
        # KL: sum(p_t * (log p_t - p_s)) with log p_t = tz - log(sum_tz)
        kl_row = jnp.sum(p_t * ((tz - log_sum_t) - p_s), axis=-1, keepdims=True)  # (tb, 1)

        per_row = ALPHA * kl_row + (1.0 - ALPHA) * ce_row
        out_ref[0, 0] = jnp.sum(jnp.where(row_mask, per_row, 0.0))

    grid_spec = pltpu.PrefetchScalarGridSpec(
        num_scalar_prefetch=0,
        grid=(num_tiles,),
        in_specs=[
            pl.BlockSpec((tb, C), lambda i: (i, 0)),   # student logits (bf16)
            pl.BlockSpec((tb, C), lambda i: (i, 0)),   # teacher logits (bf16)
            pl.BlockSpec((tb, 1), lambda i: (i, 0)),   # int32 labels
            pl.BlockSpec((1, C), lambda i: (0, 0)),    # class-weight row (f32)
        ],
        out_specs=pl.BlockSpec((1, 1), lambda i: (i, 0),
                               memory_space=pltpu.MemorySpace.SMEM),
    )

    partials = pl.pallas_call(
        kernel,
        out_shape=jax.ShapeDtypeStruct((num_tiles, 1), jnp.float32),
        grid_spec=grid_spec,
        compiler_params=pltpu.CompilerParams(
            # independent per-tile partials => batch axis shards across both v7x
            # TensorCores; no serial scalar accumulator.
            dimension_semantics=("parallel",),
            vmem_limit_bytes=vmem_limit,
        ),
    )(student_logits, teacher_logits_sliced, labels2d, class_weights_row)

    return jnp.sum(partials)


# ---- plain-JAX glue ---------------------------------------------------------
def synthetic_teacher(input_ids, attention_mask, emb, w_out, b_out):
    """Deterministic stand-in for the pretrained teacher_model (glue, not hot path):
    embedding lookup -> masked mean pool -> dense logits."""
    e = emb[input_ids]                                    # (B, S, H)
    m = attention_mask[..., None].astype(jnp.float32)     # (B, S, 1)
    pooled = jnp.sum(e * m, axis=1) / jnp.maximum(jnp.sum(m, axis=1), 1.0)
    return pooled @ w_out + b_out                         # (B, teacher_dim)


def label_smoothing_fn(ls, target):
    """CELoss.label_smoothing_fn, keep_sum=True branch (reference-side only)."""
    s = jnp.sum(target, axis=1)
    bias = s * ls / (target.shape[1] - s)
    slope = 1.0 - ls - bias
    return slope[:, None] * target + bias[:, None]


def reference_loss(x, t_sliced, labels, w_row):
    """Pure-JAX reference, faithful to the torch module (KLDivLoss receives
    softmax(x) as 'input', not log-softmax)."""
    x = x.astype(jnp.float32)
    t_sliced = t_sliced.astype(jnp.float32)
    C = x.shape[-1]
    y = jax.nn.one_hot(labels, C, dtype=jnp.float32)
    if LABEL_SMOOTHING > 0:
        y = label_smoothing_fn(LABEL_SMOOTHING, y)
    log_sm_x = jax.nn.log_softmax(x / TEMPERATURE, axis=-1)
    target_loss = jnp.sum((-y * log_sm_x) * w_row)
    p_s = jax.nn.softmax(x, axis=-1)
    log_p_t = jax.nn.log_softmax(t_sliced, axis=-1)
    p_t = jnp.exp(log_p_t)
    distr_loss = jnp.sum(p_t * (log_p_t - p_s))
    return ALPHA * distr_loss + (1.0 - ALPHA) * target_loss


if __name__ == "__main__":
    B, S, C, H, V = 32, 8, 32, 32, 50          # batch, seq, n_classes, hidden, vocab
    TEACHER_DIM = C + 4                        # teacher output sliced to C

    key = jax.random.PRNGKey(0)
    k1, k2, k3, k4, k5, k6 = jax.random.split(key, 6)

    # teacher "tokens"
    input_ids = jax.random.randint(k1, (B, S), 0, V)
    attention_mask = (jax.random.uniform(k2, (B, S)) > 0.2).astype(jnp.int32)

    # deterministic synthetic teacher parameters
    emb = jax.random.normal(k3, (V, H), dtype=jnp.float32) * 0.1
    w_out = jax.random.normal(k4, (H, TEACHER_DIM), dtype=jnp.float32) * 0.1
    b_out = jnp.linspace(-0.1, 0.1, TEACHER_DIM, dtype=jnp.float32)

    # student logits and integer labels
    student_logits = jax.random.normal(k5, (B, C), dtype=jnp.float32)
    labels = jax.random.randint(k6, (B,), 0, C)

    # deterministic (non-uniform) class weights, row layout for lane broadcast
    class_weights_row = jnp.linspace(0.5, 1.5, C, dtype=jnp.float32)[None, :]

    # ---- glue matching the torch forward ------------------------------------
    teacher_full = synthetic_teacher(input_ids, attention_mask, emb, w_out, b_out)
    teacher_sliced = teacher_full[:, :C]                  # input_teacher[:, :input.shape[-1]]

    # bf16 at the kernel boundary (half HBM bytes); compute stays f32 in-kernel.
    x_bf = student_logits.astype(jnp.bfloat16)
    t_bf = teacher_sliced.astype(jnp.bfloat16)

    # ---- Pallas kernel -------------------------------------------------------
    loss = distil_loss_pallas(x_bf, t_bf, labels, class_weights_row)
    loss = jax.block_until_ready(loss)

    # reference on the identical (bf16-rounded) values, upcast to f32
    ref = reference_loss(x_bf, t_bf, labels, class_weights_row)
    # tolerance leaves room for the approx-reciprocal student softmax and the
    # reordered (row-first) f32 reduction; still a 0.05%-level check.
    np.testing.assert_allclose(np.asarray(loss), np.asarray(ref),
                               rtol=5e-4, atol=1e-3)
    print("KERNEL_OK")
</pallas_src>

<mosaic_0001>
module attributes {stable_mosaic.version = 11 : i64} {
  func.func @kernel(%arg0: i32, %arg1: memref<32x32xbf16, #tpu.memory_space<vmem>>, %arg2: memref<32x32xbf16, #tpu.memory_space<vmem>>, %arg3: memref<32x1xi32, #tpu.memory_space<vmem>>, %arg4: memref<1x32xf32, #tpu.memory_space<vmem>>, %arg5: memref<1x1xf32, #tpu.memory_space<smem>>) attributes {dimension_semantics = [#tpu.dimension_semantics<parallel>], iteration_bounds = array<i64: 1>, scalar_prefetch = 0 : i64, scratch_operands = 0 : i64, tpu.core_type = #tpu.core_type<tc>, window_params = [{transform_indices = @transform_0, window_bounds = array<i64: 32, 32>}, {transform_indices = @transform_1, window_bounds = array<i64: 32, 32>}, {transform_indices = @transform_2, window_bounds = array<i64: 32, 1>}, {pipeline_mode = #tpu.pipeline_mode<synchronous>, transform_indices = @transform_3, window_bounds = array<i64: 1, 32>}, {transform_indices = @transform_4, window_bounds = array<i64: 1, 1>}]} {
    %c32_i32 = arith.constant 32 : i32
    %0 = arith.muli %arg0, %c32_i32 : i32
    %c32_i32_0 = arith.constant 32 : i32
    %1 = arith.subi %c32_i32_0, %0 : i32
    %c32_i32_1 = arith.constant 32 : i32
    %2 = arith.minsi %1, %c32_i32_1 : i32
    %3 = tpu.iota {dimensions = array<i32: 0>} : vector<32x1xi32>
    %4 = vector.broadcast %2 : i32 to vector<32x1xi32>
    %5 = arith.cmpi slt, %3, %4 : vector<32x1xi32>
    %c0 = arith.constant 0 : index
    %c0_2 = arith.constant 0 : index
    %6 = vector.load %arg1[%c0, %c0_2] : memref<32x32xbf16, #tpu.memory_space<vmem>>, vector<32x32xbf16>
    %7 = arith.extf %6 : vector<32x32xbf16> to vector<32x32xf32>
    %cst = arith.constant 0.000000e+00 : f32
    %8 = vector.shape_cast %5 : vector<32x1xi1> to vector<32x1xi1>
    %9 = vector.broadcast %8 : vector<32x1xi1> to vector<32x32xi1>
    %10 = vector.broadcast %cst : f32 to vector<32x32xf32>
    %11 = arith.select %9, %7, %10 : vector<32x32xi1>, vector<32x32xf32>
    %c0_3 = arith.constant 0 : index
    %c0_4 = arith.constant 0 : index
    %12 = vector.load %arg2[%c0_3, %c0_4] : memref<32x32xbf16, #tpu.memory_space<vmem>>, vector<32x32xbf16>
    %13 = arith.extf %12 : vector<32x32xbf16> to vector<32x32xf32>
    %cst_5 = arith.constant 0.000000e+00 : f32
    %14 = vector.shape_cast %5 : vector<32x1xi1> to vector<32x1xi1>
    %15 = vector.broadcast %14 : vector<32x1xi1> to vector<32x32xi1>
    %16 = vector.broadcast %cst_5 : f32 to vector<32x32xf32>
    %17 = arith.select %15, %13, %16 : vector<32x32xi1>, vector<32x32xf32>
    %c0_6 = arith.constant 0 : index
    %c0_7 = arith.constant 0 : index
    %18 = vector.load %arg4[%c0_6, %c0_7] : memref<1x32xf32, #tpu.memory_space<vmem>>, vector<1x32xf32>
    %c0_8 = arith.constant 0 : index
    %c0_9 = arith.constant 0 : index
    %19 = vector.load %arg3[%c0_8, %c0_9] : memref<32x1xi32, #tpu.memory_space<vmem>>, vector<32x1xi32>
    %20 = tpu.iota {dimensions = array<i32: 1>} : vector<32x32xi32>
    %21 = vector.broadcast %19 : vector<32x1xi32> to vector<32x32xi32>
    %22 = arith.cmpi eq, %20, %21 : vector<32x32xi32>
    %23 = arith.extui %22 : vector<32x32xi1> to vector<32x32xi32>
    %24 = arith.sitofp %23 : vector<32x32xi32> to vector<32x32xf32>
    %cst_10 = arith.constant dense<0xFF800000> : vector<32xf32>
    %25 = vector.multi_reduction <maximumf>, %11, %cst_10 [1] : vector<32x32xf32> to vector<32xf32>
    %26 = vector.shape_cast %25 : vector<32xf32> to vector<32x1xf32>
    %27 = vector.broadcast %26 : vector<32x1xf32> to vector<32x32xf32>
    %28 = arith.subf %11, %27 : vector<32x32xf32>
    %29 = math.exp %28 : vector<32x32xf32>
    %cst_11 = arith.constant dense<0.000000e+00> : vector<32xf32>
    %30 = vector.multi_reduction <add>, %29, %cst_11 [1] : vector<32x32xf32> to vector<32xf32>
    %31 = vector.shape_cast %30 : vector<32xf32> to vector<32x1xf32>
    %32 = math.log %31 : vector<32x1xf32>
    %33 = tpu.reciprocal %31 {approx = true} : vector<32x1xf32> -> vector<32x1xf32>
    %34 = vector.broadcast %33 : vector<32x1xf32> to vector<32x32xf32>
    %35 = arith.mulf %29, %34 : vector<32x32xf32>
    %cst_12 = arith.constant dense<0xFF800000> : vector<32xf32>
    %36 = vector.multi_reduction <maximumf>, %17, %cst_12 [1] : vector<32x32xf32> to vector<32xf32>
    %37 = vector.shape_cast %36 : vector<32xf32> to vector<32x1xf32>
    %38 = vector.broadcast %37 : vector<32x1xf32> to vector<32x32xf32>
    %39 = arith.subf %17, %38 : vector<32x32xf32>
    %40 = math.exp %39 : vector<32x32xf32>
    %cst_13 = arith.constant dense<0.000000e+00> : vector<32xf32>
    %41 = vector.multi_reduction <add>, %40, %cst_13 [1] : vector<32x32xf32> to vector<32xf32>
    %42 = vector.shape_cast %41 : vector<32xf32> to vector<32x1xf32>
    %43 = math.log %42 : vector<32x1xf32>
    %44 = tpu.reciprocal %42 : vector<32x1xf32> -> vector<32x1xf32>
    %45 = vector.broadcast %44 : vector<32x1xf32> to vector<32x32xf32>
    %46 = arith.mulf %40, %45 : vector<32x32xf32>
    %47 = vector.broadcast %18 : vector<1x32xf32> to vector<32x32xf32>
    %48 = arith.mulf %47, %24 : vector<32x32xf32>
    %cst_14 = arith.constant 0.000000e+00 : f32
    %49 = vector.broadcast %cst_14 : f32 to vector<32x32xf32>
    %50 = arith.subf %49, %48 : vector<32x32xf32>
    %51 = arith.mulf %50, %28 : vector<32x32xf32>
    %cst_15 = arith.constant dense<0.000000e+00> : vector<32xf32>
    %52 = vector.multi_reduction <add>, %51, %cst_15 [1] : vector<32x32xf32> to vector<32xf32>
    %53 = vector.shape_cast %52 : vector<32xf32> to vector<32x1xf32>
    %cst_16 = arith.constant dense<0.000000e+00> : vector<32xf32>
    %54 = vector.multi_reduction <add>, %48, %cst_16 [1] : vector<32x32xf32> to vector<32xf32>
    %55 = vector.shape_cast %54 : vector<32xf32> to vector<32x1xf32>
    %56 = arith.mulf %32, %55 : vector<32x1xf32>
    %57 = arith.addf %53, %56 : vector<32x1xf32>
    %58 = vector.broadcast %43 : vector<32x1xf32> to vector<32x32xf32>
    %59 = arith.subf %39, %58 : vector<32x32xf32>
    %60 = arith.subf %59, %35 : vector<32x32xf32>
    %61 = arith.mulf %46, %60 : vector<32x32xf32>
    %cst_17 = arith.constant dense<0.000000e+00> : vector<32xf32>
    %62 = vector.multi_reduction <add>, %61, %cst_17 [1] : vector<32x32xf32> to vector<32xf32>
    %63 = vector.shape_cast %62 : vector<32xf32> to vector<32x1xf32>
    %cst_18 = arith.constant 1.000000e-01 : f32
    %64 = vector.broadcast %cst_18 : f32 to vector<32x1xf32>
    %65 = arith.mulf %64, %63 : vector<32x1xf32>
    %cst_19 = arith.constant 0.899999976 : f32
    %66 = vector.broadcast %cst_19 : f32 to vector<32x1xf32>
    %67 = arith.mulf %66, %57 : vector<32x1xf32>
    %68 = arith.addf %65, %67 : vector<32x1xf32>
    %cst_20 = arith.constant 0.000000e+00 : f32
    %69 = vector.broadcast %cst_20 : f32 to vector<32x1xf32>
    %70 = arith.select %5, %68, %69 : vector<32x1xi1>, vector<32x1xf32>
    %71 = vector.shape_cast %70 : vector<32x1xf32> to vector<1x32x1xf32>
    %cst_21 = arith.constant dense<0.000000e+00> : vector<1xf32>
    %72 = vector.multi_reduction <add>, %71, %cst_21 [1, 2] : vector<1x32x1xf32> to vector<1xf32>
    %73 = vector.shape_cast %72 : vector<1xf32> to vector<1x1x1xf32>
    %74 = vector.extract %73[0, 0, 0] : f32 from vector<1x1x1xf32>
    %c0_22 = arith.constant 0 : index
    %c0_23 = arith.constant 0 : index
    %75 = memref.load %arg5[%c0_22, %c0_23] : memref<1x1xf32, #tpu.memory_space<smem>>
    memref.store %74, %arg5[%c0_22, %c0_23] : memref<1x1xf32, #tpu.memory_space<smem>>
    return
  }
  func.func @transform_0(%arg0: i32) -> (i32, i32) {
    %c0_i32 = arith.constant 0 : i32
    %c0_i32_0 = arith.constant 0 : i32
    return %arg0, %c0_i32 : i32, i32
  }
  func.func @transform_1(%arg0: i32) -> (i32, i32) {
    %c0_i32 = arith.constant 0 : i32
    %c0_i32_0 = arith.constant 0 : i32
    return %arg0, %c0_i32 : i32, i32
  }
  func.func @transform_2(%arg0: i32) -> (i32, i32) {
    %c0_i32 = arith.constant 0 : i32
    %c0_i32_0 = arith.constant 0 : i32
    return %arg0, %c0_i32 : i32, i32
  }
  func.func @transform_3(%arg0: i32) -> (i32, i32) {
    %c0_i32 = arith.constant 0 : i32
    %c0_i32_0 = arith.constant 0 : i32
    %c0_i32_1 = arith.constant 0 : i32
    return %c0_i32, %c0_i32_0 : i32, i32
  }
  func.func @transform_4(%arg0: i32) -> (i32, i32) {
    %c0_i32 = arith.constant 0 : i32
    %c0_i32_0 = arith.constant 0 : i32
    return %arg0, %c0_i32 : i32, i32
  }
}

</mosaic_0001>

<llo_original>
// kernel: tpu_custom_call.1
$region0: #{tpu_custom_call.1}
  #allocation0 [shape = 'u32[]', space=smem, size = 0x4, offset = 0x4, fixed_abs, tag = 'smem constant byte address 0x4 - core index']
  #allocation1 [shape = 'u32[72,128]{1,0:T(1,128)}', space=vmem, size = 0x9000, scoped, tag = 'internal scratch']
  %s0 = inlined_call_operand.vmem [shape: bf16[32,32], index: 0, kind: input, shape index: {}]
  %s1 = inlined_call_operand.vmem [shape: bf16[32,32], index: 1, kind: input, shape index: {}]
  %s2 = inlined_call_operand.vmem [shape: s32[32,1], index: 2, kind: input, shape index: {}]
  %s3 = inlined_call_operand.vmem [shape: f32[1,32], index: 3, kind: input, shape index: {}]
  %s4 = inlined_call_operand.hbm [shape: f32[1,1], index: 4, kind: output, shape index: {}]
  %s5 = sld [smem:[#allocation0]]
  $region26: #{tpu_custom_call.1} parent=0
    _
  %s7 = ssub.s32 1, %s5
  %s8 = scalar_select 0, %s7, %s5
  $region1: #{tpu_custom_call.1} parent=0
    #allocation2 [shape = 'u8[512]{0}', space=smem, size = 0x200, scoped, tag = 'output window, operand 0, single buffered']
    #allocation3 [shape = 's32[1]{0}', space=sflag, size = 0x4, scoped, tag = 'scoped memory for tpu_custom_call.1']
    %9 = vsyncpa [#allocation3], 0
    // Predicated region
    $region2: #{tpu_custom_call.1} parent=1 // pred_check
      _
    $region3: #{tpu_custom_call.1} parent=1 // pred_check_branch
      %11 = sbr.rel (0) target = $region5
    $region4: #{tpu_custom_call.1} parent=1 // pred_region
      _
    $region5: #{tpu_custom_call.1} parent=1 // pred_fallthru
      _
    // Predicated region
    $region6: #{tpu_custom_call.1} parent=1 // pred_check
      _
    $region7: #{tpu_custom_call.1} parent=1 // pred_check_branch
      %13 = sbr.rel (0) target = $region9
    $region8: #{tpu_custom_call.1} parent=1 // pred_region
      _
    $region9: #{tpu_custom_call.1} parent=1 // pred_fallthru
      _
    // Predicated region
    $region10: #{tpu_custom_call.1} parent=1 // pred_check
      _
    $region11: #{tpu_custom_call.1} parent=1 // pred_check_branch
      %15 = sbr.rel (0) target = $region13
    $region12: #{tpu_custom_call.1} parent=1 // pred_region
      _
    $region13: #{tpu_custom_call.1} parent=1 // pred_fallthru
      _
    // Predicated region
    $region14: #{tpu_custom_call.1} parent=1 // pred_check
      _
    $region15: #{tpu_custom_call.1} parent=1 // pred_check_branch
      %17 = sbr.rel (0) target = $region17
    $region16: #{tpu_custom_call.1} parent=1 // pred_region
      _
    $region17: #{tpu_custom_call.1} parent=1 // pred_fallthru
      _
    %s18 = smul.u32 0, 32
    %s19 = ssub.s32 32, %s18
    %p20 = scmp.lt.s32.totalorder %s19, 32
    %s21 = scalar_select %p20, %s19, 32
    %v22 = vlaneseq
    %v23 = vshrl.u32 %v22, 7
    %v24 = vadd.s32 %v23, 8
    %v25 = vadd.s32 %v23, 16
    %v26 = vadd.s32 %v23, 24
    %v27 = vstv %s21
    %vm28 = vcmp.lt.s32.totalorder %v23, %v27
    %vm29 = vcmp.lt.s32.totalorder %v24, %v27
    %vm30 = vcmp.lt.s32.totalorder %v25, %v27
    %vm31 = vcmp.lt.s32.totalorder %v26, %v27
    %v32 = vld [vmem:[%s0] sm:$0xf]
    %v33 = vld [vmem:[%s0 + $0x4] sm:$0xf]
    %v34 = vld [vmem:[%s0 + $0x8] sm:$0xf]
    %v35 = vld [vmem:[%s0 + $0xc] sm:$0xf]
    %v36 = vunpack.c.l.bf16 %v32
    %v37 = vunpack.c.l.bf16 %v33
    %v38 = vunpack.c.l.bf16 %v34
    %v39 = vunpack.c.l.bf16 %v35
    %v40 = vsel %vm28, 1, 0
    %v41 = vsel %vm29, 1, 0
    %v42 = vsel %vm30, 1, 0
    %v43 = vsel %vm31, 1, 0
    %vm44 = vcmp.eq.s32.totalorder %v40, 1
    %vm45 = vcmp.eq.s32.totalorder %v41, 1
    %vm46 = vcmp.eq.s32.totalorder %v42, 1
    %vm47 = vcmp.eq.s32.totalorder %v43, 1
    %v48 = vsel %vm44, %v36, 0.0
    %v49 = vsel %vm45, %v37, 0.0
    %v50 = vsel %vm46, %v38, 0.0
    %v51 = vsel %vm47, %v39, 0.0
    %v52 = vld [vmem:[%s1] sm:$0xf]
    %v53 = vld [vmem:[%s1 + $0x4] sm:$0xf]
    %v54 = vld [vmem:[%s1 + $0x8] sm:$0xf]
    %v55 = vld [vmem:[%s1 + $0xc] sm:$0xf]
    %v56 = vunpack.c.l.bf16 %v52
    %v57 = vunpack.c.l.bf16 %v53
    %v58 = vunpack.c.l.bf16 %v54
    %v59 = vunpack.c.l.bf16 %v55
    %v60 = vsel %vm44, %v56, 0.0
    %v61 = vsel %vm45, %v57, 0.0
    %v62 = vsel %vm46, %v58, 0.0
    %v63 = vsel %vm47, %v59, 0.0
    %v64 = vld [vmem:[%s3] sm:$0x1]
    %v65 = vld [vmem:[%s2] sm:$0xff]
    %v66 = vld [vmem:[%s2 + $0x8] sm:$0xff]
    %v67 = vld [vmem:[%s2 + $0x10] sm:$0xff]
    %v68 = vld [vmem:[%s2 + $0x18] sm:$0xff]
    %v69 = vlaneseq
    %v70 = vand.u32 %v69, 127
    %71 = vset.pattern.permute.xlu0 0
    %72 = vperm.xlu0 %71, %v65
    %v73 = vpop.permute.xlu0 %72
    %74 = vset.pattern.permute.xlu0 0
    %75 = vperm.xlu0 %74, %v66
    %v76 = vpop.permute.xlu0 %75
    %77 = vset.pattern.permute.xlu0 0
    %78 = vperm.xlu0 %77, %v67
    %v79 = vpop.permute.xlu0 %78
    %80 = vset.pattern.permute.xlu0 0
    %81 = vperm.xlu0 %80, %v68
    %v82 = vpop.permute.xlu0 %81
    %vm83 = vcmp.eq.s32.totalorder %v70, %v73
    %vm84 = vcmp.eq.s32.totalorder %v70, %v76
    %vm85 = vcmp.eq.s32.totalorder %v70, %v79
    %vm86 = vcmp.eq.s32.totalorder %v70, %v82
    %v87 = vsel %vm83, 1, 0
    %v88 = vsel %vm84, 1, 0
    %v89 = vsel %vm85, 1, 0
    %v90 = vsel %vm86, 1, 0
    %v91 = vcvt.s32.f32 %v87
    %v92 = vcvt.s32.f32 %v88
    %v93 = vcvt.s32.f32 %v89
    %v94 = vcvt.s32.f32 %v90
    %vm95 = vcmask 261120
    %v96 = vsel %vm95, %v48, -inf
    %97 = vmax.xlane.f32.xlu0 %v96
    %v98 = vpop.xlane.xlu0 %97
    %v99 = vsel %vm95, %v49, -inf
    %100 = vmax.xlane.f32.xlu0 %v99
    %v101 = vpop.xlane.xlu0 %100
    %v102 = vsel %vm95, %v50, -inf
    %103 = vmax.xlane.f32.xlu0 %v102
    %v104 = vpop.xlane.xlu0 %103
    %v105 = vsel %vm95, %v51, -inf
    %106 = vmax.xlane.f32.xlu0 %v105
    %v107 = vpop.xlane.xlu0 %106
    %v108 = vsub.f32 %v48, %v98
    %v109 = vsub.f32 %v49, %v101
    %v110 = vsub.f32 %v50, %v104
    %v111 = vsub.f32 %v51, %v107
    %v112 = vmul.f32 %v108, 1.442695
    %v113 = vpow.pop %v112
    %v114 = vmul.f32 %v109, 1.442695
    %v115 = vpow.pop %v114
    %v116 = vmul.f32 %v110, 1.442695
    %v117 = vpow.pop %v116
    %v118 = vmul.f32 %v111, 1.442695
    %v119 = vpow.pop %v118
    %v120 = vsel %vm95, %v113, 0.0
    %121 = vadd.xlane.f32.xlu0 %v120
    %v122 = vpop.xlane.xlu0 %121
    %v123 = vsel %vm95, %v115, 0.0
    %124 = vadd.xlane.f32.xlu0 %v123
    %v125 = vpop.xlane.xlu0 %124
    %v126 = vsel %vm95, %v117, 0.0
    %127 = vadd.xlane.f32.xlu0 %v126
    %v128 = vpop.xlane.xlu0 %127
    %v129 = vsel %vm95, %v119, 0.0
    %130 = vadd.xlane.f32.xlu0 %v129
    %v131 = vpop.xlane.xlu0 %130
    %v132 = vlog2.pop %v122
    %v133 = vmul.f32 %v132, 0.6931472
    %v134 = vlog2.pop %v125
    %v135 = vmul.f32 %v134, 0.6931472
    %v136 = vlog2.pop %v128
    %v137 = vmul.f32 %v136, 0.6931472
    %v138 = vlog2.pop %v131
    %v139 = vmul.f32 %v138, 0.6931472
    %v140 = vrcp.pop %v122
    %v141 = vrcp.pop %v125
    %v142 = vrcp.pop %v128
    %v143 = vrcp.pop %v131
    %v144 = vmul.f32 %v113, %v140
    %v145 = vmul.f32 %v115, %v141
    %v146 = vmul.f32 %v117, %v142
    %v147 = vmul.f32 %v119, %v143
    %v148 = vsel %vm95, %v60, -inf
    %149 = vmax.xlane.f32.xlu0 %v148
    %v150 = vpop.xlane.xlu0 %149
    %v151 = vsel %vm95, %v61, -inf
    %152 = vmax.xlane.f32.xlu0 %v151
    %v153 = vpop.xlane.xlu0 %152
    %v154 = vsel %vm95, %v62, -inf
    %155 = vmax.xlane.f32.xlu0 %v154
    %v156 = vpop.xlane.xlu0 %155
    %v157 = vsel %vm95, %v63, -inf
    %158 = vmax.xlane.f32.xlu0 %v157
    %v159 = vpop.xlane.xlu0 %158
    %v160 = vsub.f32 %v60, %v150
    %v161 = vsub.f32 %v61, %v153
    %v162 = vsub.f32 %v62, %v156
    %v163 = vsub.f32 %v63, %v159
    %v164 = vmul.f32 %v160, 1.442695
    %v165 = vpow.pop %v164
    %v166 = vmul.f32 %v161, 1.442695
    %v167 = vpow.pop %v166
    %v168 = vmul.f32 %v162, 1.442695
    %v169 = vpow.pop %v168
    %v170 = vmul.f32 %v163, 1.442695
    %v171 = vpow.pop %v170
    %v172 = vsel %vm95, %v165, 0.0
    %173 = vadd.xlane.f32.xlu0 %v172
    %v174 = vpop.xlane.xlu0 %173
    %v175 = vsel %vm95, %v167, 0.0
    %176 = vadd.xlane.f32.xlu0 %v175
    %v177 = vpop.xlane.xlu0 %176
    %v178 = vsel %vm95, %v169, 0.0
    %179 = vadd.xlane.f32.xlu0 %v178
    %v180 = vpop.xlane.xlu0 %179
    %v181 = vsel %vm95, %v171, 0.0
    %182 = vadd.xlane.f32.xlu0 %v181
    %v183 = vpop.xlane.xlu0 %182
    %v184 = vlog2.pop %v174
    %v185 = vmul.f32 %v184, 0.6931472
    %v186 = vlog2.pop %v177
    %v187 = vmul.f32 %v186, 0.6931472
    %v188 = vlog2.pop %v180
    %v189 = vmul.f32 %v188, 0.6931472
    %v190 = vlog2.pop %v183
    %v191 = vmul.f32 %v190, 0.6931472
    %v192 = vrcp.pop %v174
    %v193 = vmul.f32 %v174, %v192
    %v194 = vsub.f32 1.0, %v193
    %v195 = vmul.f32 %v192, %v194
    %v196 = vadd.f32 %v192, %v195
    %vm197 = vweird.f32 %v174
    %vm198 = vweird.f32 %v192
    %vm199 = vmor %vm197, %vm198
    %v200 = vsel %vm199, %v192, %v196
    %v201 = vand.u32 2147483647, %v174
    %vm202 = vcmp.eq.f32.partialorder %v201, 8.507059e+37
    %v203 = vand.u32 %v174, 2147483648
    %v204 = vor.u32 1.1754944e-38, %v203
    %v205 = vsel %vm202, %v204, %v200
    %v206 = vrcp.pop %v177
    %v207 = vmul.f32 %v177, %v206
    %v208 = vsub.f32 1.0, %v207
    %v209 = vmul.f32 %v206, %v208
    %v210 = vadd.f32 %v206, %v209
    %vm211 = vweird.f32 %v177
    %vm212 = vweird.f32 %v206
    %vm213 = vmor %vm211, %vm212
    %v214 = vsel %vm213, %v206, %v210
    %v215 = vand.u32 2147483647, %v177
    %vm216 = vcmp.eq.f32.partialorder %v215, 8.507059e+37
    %v217 = vand.u32 %v177, 2147483648
    %v218 = vor.u32 1.1754944e-38, %v217
    %v219 = vsel %vm216, %v218, %v214
    %v220 = vrcp.pop %v180
    %v221 = vmul.f32 %v180, %v220
    %v222 = vsub.f32 1.0, %v221
    %v223 = vmul.f32 %v220, %v222
    %v224 = vadd.f32 %v220, %v223
    %vm225 = vweird.f32 %v180
    %vm226 = vweird.f32 %v220
    %vm227 = vmor %vm225, %vm226
    %v228 = vsel %vm227, %v220, %v224
    %v229 = vand.u32 2147483647, %v180
    %vm230 = vcmp.eq.f32.partialorder %v229, 8.507059e+37
    %v231 = vand.u32 %v180, 2147483648
    %v232 = vor.u32 1.1754944e-38, %v231
    %v233 = vsel %vm230, %v232, %v228
    %v234 = vrcp.pop %v183
    %v235 = vmul.f32 %v183, %v234
    %v236 = vsub.f32 1.0, %v235
    %v237 = vmul.f32 %v234, %v236
    %v238 = vadd.f32 %v234, %v237
    %vm239 = vweird.f32 %v183
    %vm240 = vweird.f32 %v234
    %vm241 = vmor %vm239, %vm240
    %v242 = vsel %vm241, %v234, %v238
    %v243 = vand.u32 2147483647, %v183
    %vm244 = vcmp.eq.f32.partialorder %v243, 8.507059e+37
    %v245 = vand.u32 %v183, 2147483648
    %v246 = vor.u32 1.1754944e-38, %v245
    %v247 = vsel %vm244, %v246, %v242
    %v248 = vmul.f32 %v165, %v205
    %v249 = vmul.f32 %v167, %v219
    %v250 = vmul.f32 %v169, %v233
    %v251 = vmul.f32 %v171, %v247
    %v253 = vperm.slane %v64, 0
    %v255 = vmul.f32 %v253, %v91
    %v256 = vmul.f32 %v253, %v92
    %v257 = vmul.f32 %v253, %v93
    %v258 = vmul.f32 %v253, %v94
    %v259 = vsub.f32 0.0, %v255
    %v260 = vsub.f32 0.0, %v256
    %v261 = vsub.f32 0.0, %v257
    %v262 = vsub.f32 0.0, %v258
    %v263 = vmul.f32 %v259, %v108
    %v264 = vmul.f32 %v260, %v109
    %v265 = vmul.f32 %v261, %v110
    %v266 = vmul.f32 %v262, %v111
    %v267 = vsel %vm95, %v263, 0.0
    %268 = vadd.xlane.f32.xlu0 %v267
    %v269 = vpop.xlane.xlu0 %268
    %v270 = vsel %vm95, %v264, 0.0
    %271 = vadd.xlane.f32.xlu0 %v270
    %v272 = vpop.xlane.xlu0 %271
    %v273 = vsel %vm95, %v265, 0.0
    %274 = vadd.xlane.f32.xlu0 %v273
    %v275 = vpop.xlane.xlu0 %274
    %v276 = vsel %vm95, %v266, 0.0
    %277 = vadd.xlane.f32.xlu0 %v276
    %v278 = vpop.xlane.xlu0 %277
    %v279 = vsel %vm95, %v255, 0.0
    %280 = vadd.xlane.f32.xlu0 %v279
    %v281 = vpop.xlane.xlu0 %280
    %v282 = vsel %vm95, %v256, 0.0
    %283 = vadd.xlane.f32.xlu0 %v282
    %v284 = vpop.xlane.xlu0 %283
    %v285 = vsel %vm95, %v257, 0.0
    %286 = vadd.xlane.f32.xlu0 %v285
    %v287 = vpop.xlane.xlu0 %286
    %v288 = vsel %vm95, %v258, 0.0
    %289 = vadd.xlane.f32.xlu0 %v288
    %v290 = vpop.xlane.xlu0 %289
    %v291 = vmul.f32 %v133, %v281
    %v292 = vmul.f32 %v135, %v284
    %v293 = vmul.f32 %v137, %v287
    %v294 = vmul.f32 %v139, %v290
    %v295 = vadd.f32 %v269, %v291
    %v296 = vadd.f32 %v272, %v292
    %v297 = vadd.f32 %v275, %v293
    %v298 = vadd.f32 %v278, %v294
    %v299 = vsub.f32 %v160, %v185
    %v300 = vsub.f32 %v161, %v187
    %v301 = vsub.f32 %v162, %v189
    %v302 = vsub.f32 %v163, %v191
    %v303 = vsub.f32 %v299, %v144
    %v304 = vsub.f32 %v300, %v145
    %v305 = vsub.f32 %v301, %v146
    %v306 = vsub.f32 %v302, %v147
    %v307 = vmul.f32 %v248, %v303
    %v308 = vmul.f32 %v249, %v304
    %v309 = vmul.f32 %v250, %v305
    %v310 = vmul.f32 %v251, %v306
    %v311 = vsel %vm95, %v307, 0.0
    %312 = vadd.xlane.f32.xlu0 %v311
    %v313 = vpop.xlane.xlu0 %312
    %v314 = vsel %vm95, %v308, 0.0
    %315 = vadd.xlane.f32.xlu0 %v314
    %v316 = vpop.xlane.xlu0 %315
    %v317 = vsel %vm95, %v309, 0.0
    %318 = vadd.xlane.f32.xlu0 %v317
    %v319 = vpop.xlane.xlu0 %318
    %v320 = vsel %vm95, %v310, 0.0
    %321 = vadd.xlane.f32.xlu0 %v320
    %v322 = vpop.xlane.xlu0 %321
    %v323 = vmul.f32 %v313, 0.1
    %v324 = vmul.f32 %v316, 0.1
    %v325 = vmul.f32 %v319, 0.1
    %v326 = vmul.f32 %v322, 0.1
    %v327 = vmul.f32 %v295, 0.9
    %v328 = vmul.f32 %v296, 0.9
    %v329 = vmul.f32 %v297, 0.9
    %v330 = vmul.f32 %v298, 0.9
    %v331 = vadd.f32 %v323, %v327
    %v332 = vadd.f32 %v324, %v328
    %v333 = vadd.f32 %v325, %v329
    %v334 = vadd.f32 %v326, %v330
    %v335 = vsel %vm28, %v331, 0.0
    %v336 = vsel %vm29, %v332, 0.0
    %v337 = vsel %vm30, %v333, 0.0
    %v338 = vsel %vm31, %v334, 0.0
    %vm339 = vcmask 7168
    %v340 = vsel %vm339, %v335, 0.0
    %v341 = vsel %vm339, %v336, 0.0
    %v342 = vadd.f32 %v340, %v341
    %v343 = vsel %vm339, %v337, 0.0
    %v344 = vadd.f32 %v342, %v343
    %v345 = vsel %vm339, %v338, 0.0
    %v346 = vadd.f32 %v344, %v345
    %347 = vadd.xlane.f32.xlu0 %v346
    %v348 = vpop.xlane.xlu0 %347
    %v349 = vrot.slane %v348, 4
    %v350 = vadd.f32 %v348, %v349
    %v351 = vrot.slane %v350, 2
    %v352 = vadd.f32 %v350, %v351
    %v353 = vrot.slane %v352, 1
    %v354 = vadd.f32 %v352, %v353
    %s355 = vtos %v354
    %s356 = scalar_lea.smem [#allocation2], 0
    %357 = sst [smem:[%s356]] %s355
    // Predicated region
    $region18: #{tpu_custom_call.1} parent=1 // pred_check
      _
    $region19: #{tpu_custom_call.1} parent=1 // pred_check_branch
      %359 = sbr.rel (0) target = $region21
    $region20: #{tpu_custom_call.1} parent=1 // pred_region
      %361 = vsyncadd [#allocation3], 0
      %s363 = sshll.u32 %s4, 4
      %s364 = int_to_ptr.hbm [resolvable:$true] %s363
      %366 = dma.smem_to_hbm [#allocation2], 16, %s364, [#allocation3]
    $region21: #{tpu_custom_call.1} parent=1 // pred_fallthru
      _
    // Predicated region
    $region22: #{tpu_custom_call.1} parent=1 // pred_check
      _
    $region23: #{tpu_custom_call.1} parent=1 // pred_check_branch
      %368 = sbr.rel (0) target = $region25
    $region24: #{tpu_custom_call.1} parent=1 // pred_region
      %370 = dma.done [#allocation3], 16
    $region25: #{tpu_custom_call.1} parent=1 // pred_fallthru
      _
    %371 = sfence
    %372 = vsyncpa [#allocation3], 1

</llo_original>
